<compile_context>
chip_gen: v7x
topology: tpu7x:2x2x1
jax: 0.10.0
libtpu: 0.0.40
codegen_flags: <defaults>
</compile_context>

<pallas_src>
import numpy as np
import jax
import jax.numpy as jnp
from jax.experimental import pallas as pl
from jax.experimental.pallas import tpu as pltpu


NUM_MSG_TYPE = 10


class Args:
    rnn_hidden_dim = 32
    num_malicious = 2
    max_message_num_per_round = 2
    max_view_num = 4
    max_seq_num = 4
    total_client_vals = 4
    n_peers = 4


def msg_action_shape(a):
    return int(NUM_MSG_TYPE + a.num_malicious + a.max_seq_num + a.max_view_num
               + a.total_client_vals + a.n_peers + a.n_peers * 2)


def build_segments(a):
    """Static (start, length) softmax segments over the flat (B, M*S) output."""
    per_msg = ([NUM_MSG_TYPE, a.num_malicious, a.max_view_num, a.max_seq_num,
                a.total_client_vals, a.n_peers] + [2] * a.n_peers)
    S = sum(per_msg)
    M = a.max_message_num_per_round * a.num_malicious
    segs = []
    for m in range(M):
        off = m * S
        for length in per_msg:
            segs.append((off, length))
            off += length
    return tuple(segs), S, M


def _round_up(x, m):
    return (x + m - 1) // m * m


def _pick_chunk(total, cap):
    """Largest divisor of `total` that is <= cap (>= 1)."""
    best = 1
    for d in range(1, min(total, cap) + 1):
        if total % d == 0:
            best = d
    return best


def build_segment_masks(segments, out_pad):
    """Segment-membership matrices: (OUT_PAD, NSEG) for sums, (NSEG, OUT_PAD)
    for broadcasting per-segment scalars back onto lanes (pad lanes -> 0)."""
    nseg = len(segments)
    m = np.zeros((nseg, out_pad), np.float32)
    for s, (start, length) in enumerate(segments):
        m[s, start:start + length] = 1.0
    return jnp.asarray(m.T), jnp.asarray(m)


def prepare_params(raw, args, out_dim):
    """Host-side one-time param prep.

    Fuses fc1 -> GRU input projection and fc2 -> fc3 (no nonlinearity in
    between in the reference module), keeps the GRU gate weights concatenated
    [r | z | n] along the lane axis and pads them to a 128-lane multiple, and
    pads the fused output projection to a 128-lane multiple so the per-step
    q store is unmasked and lane-dense.
    """
    H = args.rnn_hidden_dim
    GP = _round_up(3 * H, 128)            # concatenated-gate width (128 for H=32)
    hp = jax.lax.Precision.HIGHEST        # exact one-time fusion

    w1, b1 = raw["w1"], raw["b1"]
    wih, bih = raw["wih"], raw["bih"]
    whh, bhh = raw["whh"], raw["bhh"]

    w_in = jnp.dot(w1, wih, precision=hp)             # (IN, 3H)  fc1 folded in
    b_in = jnp.dot(b1, wih, precision=hp) + bih       # (1, 3H)
    pad_g = GP - 3 * H
    w_in = jnp.pad(w_in, ((0, 0), (0, pad_g)))        # (IN, GP)
    b_in = jnp.pad(b_in, ((0, 0), (0, pad_g)))        # (1, GP)
    whh_p = jnp.pad(whh, ((0, 0), (0, pad_g)))        # (H, GP)
    b_hh = jnp.pad(bhh, ((0, 0), (0, pad_g)))         # (1, GP)

    w_out = jnp.dot(raw["w2"], raw["w3"], precision=hp)           # fc2@fc3
    b_out = jnp.dot(raw["b2"], raw["w3"], precision=hp) + raw["b3"]
    out_pad = _round_up(out_dim, 128)
    pad_o = out_pad - out_dim
    w_out = jnp.pad(w_out, ((0, 0), (0, pad_o)))      # (H, OUT_PAD)
    b_out = jnp.pad(b_out, ((0, 0), (0, pad_o)))      # (1, OUT_PAD)

    # NOTE: at large batch on v6e/v7x, casting w_*/x to bf16 (keeping f32
    # accumulation via preferred_element_type) halves VMEM/HBM traffic; it is
    # irrelevant at these sizes so everything stays f32.
    return {"w_in": w_in, "whh": whh_p, "b_in": b_in, "b_hh": b_hh,
            "w_out": w_out, "b_out": b_out}


def _make_kernel(H, t_chunk):
    def kernel(x_ref, h0_ref, w_in_ref, whh_ref, b_in_ref, b_hh_ref,
               w_out_ref, b_out_ref, sum_mask_ref, bcast_mask_ref,
               q_ref, h_ref):
        f32 = jnp.float32

        # Hidden state is carried in the (VMEM-resident) h output block.
        @pl.when(pl.program_id(1) == 0)
        def _():
            h_ref[...] = h0_ref[...]

        # Weights / masks are VMEM-resident for the whole grid (constant block
        # index); load once and close over them so the unrolled time loop does
        # not re-issue loads or broadcasts per iteration.
        w_in, whh = w_in_ref[...], whh_ref[...]
        b_in, b_hh = b_in_ref[...], b_hh_ref[...]
        w_out, b_out = w_out_ref[...], b_out_ref[...]
        sum_mask = sum_mask_ref[...]        # (OUT_PAD, NSEG)
        bcast_mask = bcast_mask_ref[...]    # (NSEG, OUT_PAD)

        def step(t, h):
            x = x_ref[t]                                               # (B, IN)

            # --- GRUCell (fc1 folded into the input projection) -------------
            # Two 128-lane matmuls per step; gate order along lanes: [r|z|n|0].
            gi = jnp.dot(x, w_in, preferred_element_type=f32) + b_in  # (B, GP)
            gh = jnp.dot(h, whh, preferred_element_type=f32) + b_hh   # (B, GP)
            rz = jax.nn.sigmoid(gi[:, :2 * H] + gh[:, :2 * H])        # (B, 2H)
            r = rz[:, :H]
            z = rz[:, H:2 * H]
            n = jnp.tanh(gi[:, 2 * H:3 * H] + r * gh[:, 2 * H:3 * H])
            h_new = (1.0 - z) * n + z * h                              # (B, H)

            # --- fused fc2@fc3 output projection (pad lanes stay exactly 0) --
            q = jnp.dot(h_new, w_out, preferred_element_type=f32) + b_out

            # --- segmented softmax -------------------------------------------
            # Global row-max stabilizer (shift-invariance => identical to the
            # per-segment max); clamp so a fully-underflowed segment can never
            # yield inf/nan.  One mask matmul for the per-segment sums, one to
            # broadcast the exact reciprocal back to lanes (pad lanes -> 0).
            gmax = jnp.max(q, axis=-1, keepdims=True)
            e = jnp.exp(jnp.maximum(q - gmax, -80.0))
            seg_sum = jnp.dot(e, sum_mask, preferred_element_type=f32)  # (B, NSEG)
            inv = 1.0 / seg_sum
            q_ref[t] = e * jnp.dot(inv, bcast_mask, preferred_element_type=f32)
            return h_new

        h = jax.lax.fori_loop(0, t_chunk, step, h_ref[...], unroll=True)
        h_ref[...] = h

    return kernel


def run_rnn_attacker_seq(prepared, seg_masks, x_seq, h0, *,
                         t_chunk=None, b_chunk=None):
    """Run T GRU timesteps inside ONE pallas_call.

    x_seq: (T, B, IN) f32, h0: (B, H) f32.
    Returns (q_pad (T, B, OUT_PAD) already softmax-normalized, h_T (B, H)).
    """
    sum_mask, bcast_mask = seg_masks
    T, B, IN = x_seq.shape
    H = h0.shape[-1]
    GP = prepared["w_in"].shape[-1]
    OUT_PAD = prepared["w_out"].shape[-1]
    NSEG = sum_mask.shape[-1]

    if t_chunk is None:
        t_chunk = _pick_chunk(T, 32)       # resident x/q chunks stay tiny
    if b_chunk is None:
        b_chunk = B
    assert T % t_chunk == 0
    assert B % b_chunk == 0 and (b_chunk == B or b_chunk % 8 == 0)

    grid = (B // b_chunk, T // t_chunk)    # (parallel batch chunks, time chunks)

    grid_spec = pltpu.PrefetchScalarGridSpec(
        num_scalar_prefetch=0,
        grid=grid,
        in_specs=[
            pl.BlockSpec((t_chunk, b_chunk, IN), lambda b, t: (t, b, 0)),   # x chunk
            pl.BlockSpec((b_chunk, H), lambda b, t: (b, 0)),                # h0
            pl.BlockSpec((IN, GP), lambda b, t: (0, 0)),                    # fc1@W_ih
            pl.BlockSpec((H, GP), lambda b, t: (0, 0)),                     # W_hh
            pl.BlockSpec((1, GP), lambda b, t: (0, 0)),                     # b (input side)
            pl.BlockSpec((1, GP), lambda b, t: (0, 0)),                     # b (hidden side)
            pl.BlockSpec((H, OUT_PAD), lambda b, t: (0, 0)),                # fc2@fc3
            pl.BlockSpec((1, OUT_PAD), lambda b, t: (0, 0)),                # fused out bias
            pl.BlockSpec((OUT_PAD, NSEG), lambda b, t: (0, 0)),             # segment sums
            pl.BlockSpec((NSEG, OUT_PAD), lambda b, t: (0, 0)),             # segment bcast
        ],
        out_specs=(
            pl.BlockSpec((t_chunk, b_chunk, OUT_PAD), lambda b, t: (t, b, 0)),
            pl.BlockSpec((b_chunk, H), lambda b, t: (b, 0)),                # h carry/out
        ),
    )

    q_pad, h_T = pl.pallas_call(
        _make_kernel(H, t_chunk),
        out_shape=(jax.ShapeDtypeStruct((T, B, OUT_PAD), jnp.float32),
                   jax.ShapeDtypeStruct((B, H), jnp.float32)),
        grid_spec=grid_spec,
        compiler_params=pltpu.CompilerParams(
            dimension_semantics=("parallel", "arbitrary")),
    )(x_seq, h0, prepared["w_in"], prepared["whh"], prepared["b_in"],
      prepared["b_hh"], prepared["w_out"], prepared["b_out"],
      sum_mask, bcast_mask)
    return q_pad, h_T


def split_messages(q, args):
    """Pure view glue mirroring the PyTorch tuple structure (q already softmaxed)."""
    S = msg_action_shape(args)
    M = args.max_message_num_per_round * args.num_malicious
    x = q.reshape(-1, M, S)
    sizes = [NUM_MSG_TYPE, args.num_malicious, args.max_view_num, args.max_seq_num,
             args.total_client_vals, args.n_peers, args.n_peers * 2]
    bounds, acc = [], 0
    for s in sizes[:-1]:
        acc += s
        bounds.append(acc)
    (msg_types, signer_ids, view_nums, seq_nums,
     vals, receiver_ids, certificates) = jnp.split(x, bounds, axis=2)
    certs = [certificates[..., 2 * i:2 * i + 2] for i in range(args.n_peers)]
    return (msg_types, signer_ids, view_nums, seq_nums, vals, receiver_ids, certs)


def rnn_attacker_forward(prepared, seg_masks, inputs, hidden_state, args, out_dim):
    """Single-step forward with the same semantics as RNNAttackerAgent.forward."""
    B = inputs.shape[0]
    H = args.rnn_hidden_dim
    h0 = jnp.broadcast_to(hidden_state.reshape(-1, H), (B, H)).astype(jnp.float32)
    q_pad, h = run_rnn_attacker_seq(prepared, seg_masks, inputs[None], h0)
    q = q_pad[0, :, :out_dim]
    return split_messages(q, args), h


def reference_seq(raw, x_seq, h0, args, segments):
    """Pure-JAX, unfused reference of the original module (scan over time)."""
    H = args.rnn_hidden_dim

    def step(h, x):
        x1 = x @ raw["w1"] + raw["b1"]
        gi = x1 @ raw["wih"] + raw["bih"]
        gh = h @ raw["whh"] + raw["bhh"]
        r = jax.nn.sigmoid(gi[:, :H] + gh[:, :H])
        z = jax.nn.sigmoid(gi[:, H:2 * H] + gh[:, H:2 * H])
        n = jnp.tanh(gi[:, 2 * H:] + r * gh[:, 2 * H:])
        h_new = (1.0 - z) * n + z * h
        q = (h_new @ raw["w2"] + raw["b2"]) @ raw["w3"] + raw["b3"]
        probs = jnp.concatenate(
            [jax.nn.softmax(q[:, s:s + l], axis=-1) for (s, l) in segments], axis=-1)
        return h_new, probs

    h_T, qs = jax.lax.scan(step, h0, x_seq)
    return qs, h_T


if __name__ == "__main__":
    args = Args()
    segments, S, M = build_segments(args)
    OUT = M * S                      # 4 * 36 = 144
    OUT_PAD = _round_up(OUT, 128)    # 256 -> unmasked lane-dense stores
    IN = 48
    H = args.rnn_hidden_dim
    B = 16                           # per review: batch a multiple of 8 (sublanes)
    T = 6

    key = jax.random.PRNGKey(0)
    ks = jax.random.split(key, 12)

    def w(k, shp):
        return jax.random.normal(k, shp, jnp.float32) * 0.1

    raw = {
        "w1": w(ks[0], (IN, H)),      "b1": w(ks[1], (1, H)),
        "wih": w(ks[2], (H, 3 * H)),  "bih": w(ks[3], (1, 3 * H)),
        "whh": w(ks[4], (H, 3 * H)),  "bhh": w(ks[5], (1, 3 * H)),
        "w2": w(ks[6], (H, H)),       "b2": w(ks[7], (1, H)),
        "w3": w(ks[8], (H, OUT)),     "b3": w(ks[9], (1, OUT)),
    }
    prepared = prepare_params(raw, args, OUT)
    seg_masks = build_segment_masks(segments, OUT_PAD)

    x_seq = jax.random.normal(ks[10], (T, B, IN), jnp.float32)
    h_init = jnp.zeros((1, H), jnp.float32)          # init_hidden()

    # --- single-step forward (module semantics) ---
    msgs, h1 = rnn_attacker_forward(prepared, seg_masks, x_seq[0], h_init, args, OUT)
    jax.block_until_ready((msgs, h1))
    assert msgs[0].shape == (B, M, NUM_MSG_TYPE)
    assert h1.shape == (B, H)
    assert bool(jnp.allclose(jnp.sum(msgs[0], axis=-1), 1.0, atol=1e-3))
    assert bool(jnp.allclose(jnp.sum(msgs[5], axis=-1), 1.0, atol=1e-3))
    assert bool(jnp.allclose(jnp.sum(msgs[6][0], axis=-1), 1.0, atol=1e-3))

    # --- T timesteps inside one pallas_call: time loop inside the kernel,
    #     weights resident in VMEM, two batch chunks on the parallel axis ---
    h0_b = jnp.broadcast_to(h_init, (B, H))
    q_pad, h_T = run_rnn_attacker_seq(prepared, seg_masks, x_seq, h0_b, b_chunk=8)
    q_seq = q_pad[..., :OUT]
    jax.block_until_ready((q_seq, h_T))

    # --- compare against the pure-JAX unfused reference ---
    q_exp, h_exp = reference_seq(raw, x_seq, h0_b, args, segments)
    assert bool(jnp.allclose(q_seq, q_exp, atol=2e-2))
    assert bool(jnp.allclose(h_T, h_exp, atol=2e-2))
    assert bool(jnp.allclose(q_pad[..., OUT:], 0.0, atol=1e-6))

    print("KERNEL_OK")
</pallas_src>

<mosaic_0001>
module attributes {stable_mosaic.version = 11 : i64} {
  func.func @kernel(%arg0: i32, %arg1: i32, %arg2: memref<1x16x48xf32, #tpu.memory_space<vmem>>, %arg3: memref<16x32xf32, #tpu.memory_space<vmem>>, %arg4: memref<48x128xf32, #tpu.memory_space<vmem>>, %arg5: memref<32x128xf32, #tpu.memory_space<vmem>>, %arg6: memref<1x128xf32, #tpu.memory_space<vmem>>, %arg7: memref<1x128xf32, #tpu.memory_space<vmem>>, %arg8: memref<32x256xf32, #tpu.memory_space<vmem>>, %arg9: memref<1x256xf32, #tpu.memory_space<vmem>>, %arg10: memref<256x40xf32, #tpu.memory_space<vmem>>, %arg11: memref<40x256xf32, #tpu.memory_space<vmem>>, %arg12: memref<1x16x256xf32, #tpu.memory_space<vmem>>, %arg13: memref<16x32xf32, #tpu.memory_space<vmem>>) attributes {dimension_semantics = [#tpu.dimension_semantics<parallel>, #tpu.dimension_semantics<arbitrary>], iteration_bounds = array<i64: 1, 1>, scalar_prefetch = 0 : i64, scratch_operands = 0 : i64, tpu.core_type = #tpu.core_type<tc>, window_params = [{transform_indices = @transform_0, window_bounds = array<i64: 1, 16, 48>}, {transform_indices = @transform_1, window_bounds = array<i64: 16, 32>}, {pipeline_mode = #tpu.pipeline_mode<synchronous>, transform_indices = @transform_2, window_bounds = array<i64: 48, 128>}, {pipeline_mode = #tpu.pipeline_mode<synchronous>, transform_indices = @transform_3, window_bounds = array<i64: 32, 128>}, {pipeline_mode = #tpu.pipeline_mode<synchronous>, transform_indices = @transform_4, window_bounds = array<i64: 1, 128>}, {pipeline_mode = #tpu.pipeline_mode<synchronous>, transform_indices = @transform_5, window_bounds = array<i64: 1, 128>}, {pipeline_mode = #tpu.pipeline_mode<synchronous>, transform_indices = @transform_6, window_bounds = array<i64: 32, 256>}, {pipeline_mode = #tpu.pipeline_mode<synchronous>, transform_indices = @transform_7, window_bounds = array<i64: 1, 256>}, {pipeline_mode = #tpu.pipeline_mode<synchronous>, transform_indices = @transform_8, window_bounds = array<i64: 256, 40>}, {pipeline_mode = #tpu.pipeline_mode<synchronous>, transform_indices = @transform_9, window_bounds = array<i64: 40, 256>}, {transform_indices = @transform_10, window_bounds = array<i64: 1, 16, 256>}, {transform_indices = @transform_11, window_bounds = array<i64: 16, 32>}]} {
    %c0_i32 = arith.constant 0 : i32
    %0 = arith.cmpi eq, %arg1, %c0_i32 : i32
    %1 = arith.extui %0 : i1 to i32
    %c0_i32_0 = arith.constant 0 : i32
    %2 = arith.cmpi ne, %1, %c0_i32_0 : i32
    scf.if %2 {
      %c0_34 = arith.constant 0 : index
      %c0_35 = arith.constant 0 : index
      %61 = vector.load %arg3[%c0_34, %c0_35] : memref<16x32xf32, #tpu.memory_space<vmem>>, vector<16x32xf32>
      %c0_36 = arith.constant 0 : index
      %c0_37 = arith.constant 0 : index
      %62 = vector.load %arg13[%c0_36, %c0_37] : memref<16x32xf32, #tpu.memory_space<vmem>>, vector<16x32xf32>
      tpu.vector_store %arg13[%c0_36, %c0_37], %61 {strides = array<i32>} : memref<16x32xf32, #tpu.memory_space<vmem>>, vector<16x32xf32>,
    } else {
    }
    %c0 = arith.constant 0 : index
    %c0_1 = arith.constant 0 : index
    %3 = vector.load %arg4[%c0, %c0_1] : memref<48x128xf32, #tpu.memory_space<vmem>>, vector<48x128xf32>
    %c0_2 = arith.constant 0 : index
    %c0_3 = arith.constant 0 : index
    %4 = vector.load %arg5[%c0_2, %c0_3] : memref<32x128xf32, #tpu.memory_space<vmem>>, vector<32x128xf32>
    %c0_4 = arith.constant 0 : index
    %c0_5 = arith.constant 0 : index
    %5 = vector.load %arg6[%c0_4, %c0_5] : memref<1x128xf32, #tpu.memory_space<vmem>>, vector<1x128xf32>
    %c0_6 = arith.constant 0 : index
    %c0_7 = arith.constant 0 : index
    %6 = vector.load %arg7[%c0_6, %c0_7] : memref<1x128xf32, #tpu.memory_space<vmem>>, vector<1x128xf32>
    %c0_8 = arith.constant 0 : index
    %c0_9 = arith.constant 0 : index
    %7 = vector.load %arg8[%c0_8, %c0_9] : memref<32x256xf32, #tpu.memory_space<vmem>>, vector<32x256xf32>
    %c0_10 = arith.constant 0 : index
    %c0_11 = arith.constant 0 : index
    %8 = vector.load %arg9[%c0_10, %c0_11] : memref<1x256xf32, #tpu.memory_space<vmem>>, vector<1x256xf32>
    %c0_12 = arith.constant 0 : index
    %c0_13 = arith.constant 0 : index
    %9 = vector.load %arg10[%c0_12, %c0_13] : memref<256x40xf32, #tpu.memory_space<vmem>>, vector<256x40xf32>
    %c0_14 = arith.constant 0 : index
    %c0_15 = arith.constant 0 : index
    %10 = vector.load %arg11[%c0_14, %c0_15] : memref<40x256xf32, #tpu.memory_space<vmem>>, vector<40x256xf32>
    %c0_16 = arith.constant 0 : index
    %c0_17 = arith.constant 0 : index
    %11 = vector.load %arg13[%c0_16, %c0_17] : memref<16x32xf32, #tpu.memory_space<vmem>>, vector<16x32xf32>
    %c0_i32_18 = arith.constant 0 : i32
    %12 = arith.index_cast %c0_i32_18 : i32 to index
    %c0_19 = arith.constant 0 : index
    %c0_20 = arith.constant 0 : index
    %13 = vector.load %arg2[%12, %c0_19, %c0_20] : memref<1x16x48xf32, #tpu.memory_space<vmem>>, vector<1x16x48xf32>
    %14 = vector.shape_cast %13 : vector<1x16x48xf32> to vector<16x48xf32>
    %cst = arith.constant dense<0.000000e+00> : vector<16x128xf32>
    %15 = tpu.matmul %14, %3, %cst {dimension_numbers = #tpu.dot_dimension_numbers<[1], [0], [0], [1], [0, 0, 1, 1], [], []>} : vector<16x48xf32>, vector<48x128xf32>, vector<16x128xf32> -> vector<16x128xf32>
    %16 = vector.broadcast %5 : vector<1x128xf32> to vector<16x128xf32>
    %17 = arith.addf %15, %16 : vector<16x128xf32>
    %cst_21 = arith.constant dense<0.000000e+00> : vector<16x128xf32>
    %18 = tpu.matmul %11, %4, %cst_21 {dimension_numbers = #tpu.dot_dimension_numbers<[1], [0], [0], [1], [0, 0, 1, 1], [], []>} : vector<16x32xf32>, vector<32x128xf32>, vector<16x128xf32> -> vector<16x128xf32>
    %19 = vector.broadcast %6 : vector<1x128xf32> to vector<16x128xf32>
    %20 = arith.addf %18, %19 : vector<16x128xf32>
    %21 = vector.extract_strided_slice %17 {offsets = [0, 0], sizes = [16, 64], strides = [1, 1]} : vector<16x128xf32> to vector<16x64xf32>
    %22 = vector.extract_strided_slice %20 {offsets = [0, 0], sizes = [16, 64], strides = [1, 1]} : vector<16x128xf32> to vector<16x64xf32>
    %23 = arith.addf %21, %22 : vector<16x64xf32>
    %24 = arith.negf %23 : vector<16x64xf32>
    %25 = math.exp %24 : vector<16x64xf32>
    %cst_22 = arith.constant 1.000000e+00 : f32
    %26 = vector.broadcast %cst_22 : f32 to vector<16x64xf32>
    %27 = arith.addf %26, %25 : vector<16x64xf32>
    %28 = arith.divf %26, %27 : vector<16x64xf32>
    %29 = vector.extract_strided_slice %28 {offsets = [0, 0], sizes = [16, 32], strides = [1, 1]} : vector<16x64xf32> to vector<16x32xf32>
    %30 = vector.extract_strided_slice %28 {offsets = [0, 32], sizes = [16, 32], strides = [1, 1]} : vector<16x64xf32> to vector<16x32xf32>
    %31 = vector.extract_strided_slice %17 {offsets = [0, 64], sizes = [16, 32], strides = [1, 1]} : vector<16x128xf32> to vector<16x32xf32>
    %32 = vector.extract_strided_slice %20 {offsets = [0, 64], sizes = [16, 32], strides = [1, 1]} : vector<16x128xf32> to vector<16x32xf32>
    %33 = arith.mulf %29, %32 : vector<16x32xf32>
    %34 = arith.addf %31, %33 : vector<16x32xf32>
    %35 = math.tanh %34 : vector<16x32xf32>
    %cst_23 = arith.constant 1.000000e+00 : f32
    %36 = vector.broadcast %cst_23 : f32 to vector<16x32xf32>
    %37 = arith.subf %36, %30 : vector<16x32xf32>
    %38 = arith.mulf %37, %35 : vector<16x32xf32>
    %39 = arith.mulf %30, %11 : vector<16x32xf32>
    %40 = arith.addf %38, %39 : vector<16x32xf32>
    %cst_24 = arith.constant dense<0.000000e+00> : vector<16x256xf32>
    %41 = tpu.matmul %40, %7, %cst_24 {dimension_numbers = #tpu.dot_dimension_numbers<[1], [0], [0], [1], [0, 0, 1, 1], [], []>} : vector<16x32xf32>, vector<32x256xf32>, vector<16x256xf32> -> vector<16x256xf32>
    %42 = vector.broadcast %8 : vector<1x256xf32> to vector<16x256xf32>
    %43 = arith.addf %41, %42 : vector<16x256xf32>
    %cst_25 = arith.constant dense<0xFF800000> : vector<16xf32>
    %44 = vector.multi_reduction <maximumf>, %43, %cst_25 [1] : vector<16x256xf32> to vector<16xf32>
    %45 = vector.shape_cast %44 : vector<16xf32> to vector<16x1xf32>
    %46 = vector.broadcast %45 : vector<16x1xf32> to vector<16x256xf32>
    %47 = arith.subf %43, %46 : vector<16x256xf32>
    %cst_26 = arith.constant -8.000000e+01 : f32
    %48 = vector.broadcast %cst_26 : f32 to vector<16x256xf32>
    %49 = arith.maximumf %47, %48 : vector<16x256xf32>
    %50 = math.exp %49 : vector<16x256xf32>
    %cst_27 = arith.constant dense<0.000000e+00> : vector<16x40xf32>
    %51 = tpu.matmul %50, %9, %cst_27 {dimension_numbers = #tpu.dot_dimension_numbers<[1], [0], [0], [1], [0, 0, 1, 1], [], []>} : vector<16x256xf32>, vector<256x40xf32>, vector<16x40xf32> -> vector<16x40xf32>
    %cst_28 = arith.constant 1.000000e+00 : f32
    %52 = vector.broadcast %cst_28 : f32 to vector<16x40xf32>
    %53 = arith.divf %52, %51 : vector<16x40xf32>
    %cst_29 = arith.constant dense<0.000000e+00> : vector<16x256xf32>
    %54 = tpu.matmul %53, %10, %cst_29 {dimension_numbers = #tpu.dot_dimension_numbers<[1], [0], [0], [1], [0, 0, 1, 1], [], []>} : vector<16x40xf32>, vector<40x256xf32>, vector<16x256xf32> -> vector<16x256xf32>
    %55 = arith.mulf %50, %54 : vector<16x256xf32>
    %56 = arith.index_cast %c0_i32_18 : i32 to index
    %c0_30 = arith.constant 0 : index
    %c0_31 = arith.constant 0 : index
    %57 = vector.load %arg12[%56, %c0_30, %c0_31] : memref<1x16x256xf32, #tpu.memory_space<vmem>>, vector<1x16x256xf32>
    %58 = vector.shape_cast %57 : vector<1x16x256xf32> to vector<16x256xf32>
    %59 = vector.shape_cast %55 : vector<16x256xf32> to vector<1x16x256xf32>
    tpu.vector_store %arg12[%56, %c0_30, %c0_31], %59 {strides = array<i32>} : memref<1x16x256xf32, #tpu.memory_space<vmem>>, vector<1x16x256xf32>,
    %c1_i32 = arith.constant 1 : i32
    %c0_32 = arith.constant 0 : index
    %c0_33 = arith.constant 0 : index
    %60 = vector.load %arg13[%c0_32, %c0_33] : memref<16x32xf32, #tpu.memory_space<vmem>>, vector<16x32xf32>
    tpu.vector_store %arg13[%c0_32, %c0_33], %40 {strides = array<i32>} : memref<16x32xf32, #tpu.memory_space<vmem>>, vector<16x32xf32>,
    return
  }
  func.func @transform_0(%arg0: i32, %arg1: i32) -> (i32, i32, i32) {
    %c0_i32 = arith.constant 0 : i32
    %c0_i32_0 = arith.constant 0 : i32
    return %arg1, %arg0, %c0_i32 : i32, i32, i32
  }
  func.func @transform_1(%arg0: i32, %arg1: i32) -> (i32, i32) {
    %c0_i32 = arith.constant 0 : i32
    %c0_i32_0 = arith.constant 0 : i32
    return %arg0, %c0_i32 : i32, i32
  }
  func.func @transform_2(%arg0: i32, %arg1: i32) -> (i32, i32) {
    %c0_i32 = arith.constant 0 : i32
    %c0_i32_0 = arith.constant 0 : i32
    %c0_i32_1 = arith.constant 0 : i32
    return %c0_i32, %c0_i32_0 : i32, i32
  }
  func.func @transform_3(%arg0: i32, %arg1: i32) -> (i32, i32) {
    %c0_i32 = arith.constant 0 : i32
    %c0_i32_0 = arith.constant 0 : i32
    %c0_i32_1 = arith.constant 0 : i32
    return %c0_i32, %c0_i32_0 : i32, i32
  }
  func.func @transform_4(%arg0: i32, %arg1: i32) -> (i32, i32) {
    %c0_i32 = arith.constant 0 : i32
    %c0_i32_0 = arith.constant 0 : i32
    %c0_i32_1 = arith.constant 0 : i32
    return %c0_i32, %c0_i32_0 : i32, i32
  }
  func.func @transform_5(%arg0: i32, %arg1: i32) -> (i32, i32) {
    %c0_i32 = arith.constant 0 : i32
    %c0_i32_0 = arith.constant 0 : i32
    %c0_i32_1 = arith.constant 0 : i32
    return %c0_i32, %c0_i32_0 : i32, i32
  }
  func.func @transform_6(%arg0: i32, %arg1: i32) -> (i32, i32) {
    %c0_i32 = arith.constant 0 : i32
    %c0_i32_0 = arith.constant 0 : i32
    %c0_i32_1 = arith.constant 0 : i32
    return %c0_i32, %c0_i32_0 : i32, i32
  }
  func.func @transform_7(%arg0: i32, %arg1: i32) -> (i32, i32) {
    %c0_i32 = arith.constant 0 : i32
    %c0_i32_0 = arith.constant 0 : i32
    %c0_i32_1 = arith.constant 0 : i32
    return %c0_i32, %c0_i32_0 : i32, i32
  }
  func.func @transform_8(%arg0: i32, %arg1: i32) -> (i32, i32) {
    %c0_i32 = arith.constant 0 : i32
    %c0_i32_0 = arith.constant 0 : i32
    %c0_i32_1 = arith.constant 0 : i32
    return %c0_i32, %c0_i32_0 : i32, i32
  }
  func.func @transform_9(%arg0: i32, %arg1: i32) -> (i32, i32) {
    %c0_i32 = arith.constant 0 : i32
    %c0_i32_0 = arith.constant 0 : i32
    %c0_i32_1 = arith.constant 0 : i32
    return %c0_i32, %c0_i32_0 : i32, i32
  }
  func.func @transform_10(%arg0: i32, %arg1: i32) -> (i32, i32, i32) {
    %c0_i32 = arith.constant 0 : i32
    %c0_i32_0 = arith.constant 0 : i32
    return %arg1, %arg0, %c0_i32 : i32, i32, i32
  }
  func.func @transform_11(%arg0: i32, %arg1: i32) -> (i32, i32) {
    %c0_i32 = arith.constant 0 : i32
    %c0_i32_0 = arith.constant 0 : i32
    return %arg0, %c0_i32 : i32, i32
  }
}

</mosaic_0001>

<llo_original>
// kernel: tpu_custom_call.1
$region0: #{tpu_custom_call.1}
  #allocation0 [shape = 'u32[]', space=smem, size = 0x4, offset = 0x4, fixed_abs, tag = 'smem constant byte address 0x4 - core index']
  #allocation1 [shape = 'u32[144,128]{1,0:T(1,128)}', space=vmem, size = 0x12000, scoped, tag = 'internal scratch']
  %s0 = inlined_call_operand.vmem [shape: f32[1,16,48], index: 0, kind: input, shape index: {}]
  %s1 = inlined_call_operand.vmem [shape: f32[16,32], index: 1, kind: input, shape index: {}]
  %s2 = inlined_call_operand.vmem [shape: f32[48,128], index: 2, kind: input, shape index: {}]
  %s3 = inlined_call_operand.vmem [shape: f32[32,128], index: 3, kind: input, shape index: {}]
  %s4 = inlined_call_operand.vmem [shape: f32[1,128], index: 4, kind: input, shape index: {}]
  %s5 = inlined_call_operand.vmem [shape: f32[1,128], index: 5, kind: input, shape index: {}]
  %s6 = inlined_call_operand.vmem [shape: f32[32,256], index: 6, kind: input, shape index: {}]
  %s7 = inlined_call_operand.vmem [shape: f32[1,256], index: 7, kind: input, shape index: {}]
  %s8 = inlined_call_operand.vmem [shape: f32[256,40], index: 8, kind: input, shape index: {}]
  %s9 = inlined_call_operand.vmem [shape: f32[40,256], index: 9, kind: input, shape index: {}]
  %s10 = inlined_call_operand.hbm [shape: f32[1,16,256], index: 10, kind: output, shape index: {0}]
  %s11 = inlined_call_operand.hbm [shape: f32[16,32], index: 11, kind: output, shape index: {1}]
  %12 = xla_tuple %s10, %s11
  %s13 = sld [smem:[#allocation0]]
  $region62: #{tpu_custom_call.1} parent=0
    _
  %s15 = ssub.s32 1, %s13
  %s16 = scalar_select 0, %s15, %s13
  $region1: #{tpu_custom_call.1} parent=0
    #allocation2 [shape = 'u8[16384]{0}', space=vmem, size = 0x4000, scoped, tag = 'output window, operand 0, single buffered']
    #allocation3 [shape = 's32[1]{0}', space=sflag, size = 0x4, scoped, tag = 'scoped memory for tpu_custom_call.1']
    #allocation4 [shape = 'u8[8192]{0}', space=vmem, size = 0x2000, scoped, tag = 'output window, operand 1, single buffered']
    #allocation5 [shape = 's32[1]{0}', space=sflag, size = 0x4, scoped, tag = 'scoped memory for tpu_custom_call.1']
    %17 = vsyncpa [#allocation3], 0
    %18 = vsyncpa [#allocation5], 0
    // Predicated region
    $region2: #{tpu_custom_call.1} parent=1 // pred_check
      _
    $region3: #{tpu_custom_call.1} parent=1 // pred_check_branch
      %20 = sbr.rel (0) target = $region5
    $region4: #{tpu_custom_call.1} parent=1 // pred_region
      _
    $region5: #{tpu_custom_call.1} parent=1 // pred_fallthru
      _
    // Predicated region
    $region6: #{tpu_custom_call.1} parent=1 // pred_check
      _
    $region7: #{tpu_custom_call.1} parent=1 // pred_check_branch
      %22 = sbr.rel (0) target = $region9
    $region8: #{tpu_custom_call.1} parent=1 // pred_region
      _
    $region9: #{tpu_custom_call.1} parent=1 // pred_fallthru
      _
    // Predicated region
    $region10: #{tpu_custom_call.1} parent=1 // pred_check
      _
    $region11: #{tpu_custom_call.1} parent=1 // pred_check_branch
      %24 = sbr.rel (0) target = $region13
    $region12: #{tpu_custom_call.1} parent=1 // pred_region
      _
    $region13: #{tpu_custom_call.1} parent=1 // pred_fallthru
      _
    // Predicated region
    $region14: #{tpu_custom_call.1} parent=1 // pred_check
      _
    $region15: #{tpu_custom_call.1} parent=1 // pred_check_branch
      %26 = sbr.rel (0) target = $region17
    $region16: #{tpu_custom_call.1} parent=1 // pred_region
      _
    $region17: #{tpu_custom_call.1} parent=1 // pred_fallthru
      _
    // Predicated region
    $region18: #{tpu_custom_call.1} parent=1 // pred_check
      _
    $region19: #{tpu_custom_call.1} parent=1 // pred_check_branch
      %28 = sbr.rel (0) target = $region21
    $region20: #{tpu_custom_call.1} parent=1 // pred_region
      _
    $region21: #{tpu_custom_call.1} parent=1 // pred_fallthru
      _
    // Predicated region
    $region22: #{tpu_custom_call.1} parent=1 // pred_check
      _
    $region23: #{tpu_custom_call.1} parent=1 // pred_check_branch
      %30 = sbr.rel (0) target = $region25
    $region24: #{tpu_custom_call.1} parent=1 // pred_region
      _
    $region25: #{tpu_custom_call.1} parent=1 // pred_fallthru
      _
    // Predicated region
    $region26: #{tpu_custom_call.1} parent=1 // pred_check
      _
    $region27: #{tpu_custom_call.1} parent=1 // pred_check_branch
      %32 = sbr.rel (0) target = $region29
    $region28: #{tpu_custom_call.1} parent=1 // pred_region
      _
    $region29: #{tpu_custom_call.1} parent=1 // pred_fallthru
      _
    // Predicated region
    $region30: #{tpu_custom_call.1} parent=1 // pred_check
      _
    $region31: #{tpu_custom_call.1} parent=1 // pred_check_branch
      %34 = sbr.rel (0) target = $region33
    $region32: #{tpu_custom_call.1} parent=1 // pred_region
      _
    $region33: #{tpu_custom_call.1} parent=1 // pred_fallthru
      _
    // Predicated region
    $region34: #{tpu_custom_call.1} parent=1 // pred_check
      _
    $region35: #{tpu_custom_call.1} parent=1 // pred_check_branch
      %36 = sbr.rel (0) target = $region37
    $region36: #{tpu_custom_call.1} parent=1 // pred_region
      _
    $region37: #{tpu_custom_call.1} parent=1 // pred_fallthru
      _
    // Predicated region
    $region38: #{tpu_custom_call.1} parent=1 // pred_check
      _
    $region39: #{tpu_custom_call.1} parent=1 // pred_check_branch
      %38 = sbr.rel (0) target = $region41
    $region40: #{tpu_custom_call.1} parent=1 // pred_region
      _
    $region41: #{tpu_custom_call.1} parent=1 // pred_fallthru
      _
    %p39 = scmp.eq.s32.totalorder 0, 0
    // Predicated region
    $region42: #{tpu_custom_call.1} parent=1 // pred_check
      %p40 = pneg %p39
    $region43: #{tpu_custom_call.1} parent=1 // pred_check_branch
      %42 = sbr.rel (%p40) target = $region45
    $region44: #{tpu_custom_call.1} parent=1 // pred_region
      %v43 = vld [vmem:[%s1] sm:$0xff]
      %v44 = vld [vmem:[%s1 + $0x8] sm:$0xff]
      %vm45 = vcmask 261120
      %46 = vst.msk [vmem:[#allocation4] sm:$0xff] %vm45, %v43
      %47 = vst.msk [vmem:[#allocation4 + $0x8] sm:$0xff] %vm45, %v44
    $region45: #{tpu_custom_call.1} parent=1 // pred_fallthru
      _
    %v48 = vld [vmem:[%s2] sm:$0xff]
    %v49 = vld [vmem:[%s2 + $0x8] sm:$0xff]
    %v50 = vld [vmem:[%s2 + $0x10] sm:$0xff]
    %v51 = vld [vmem:[%s2 + $0x18] sm:$0xff]
    %v52 = vld [vmem:[%s2 + $0x20] sm:$0xff]
    %v53 = vld [vmem:[%s2 + $0x28] sm:$0xff]
    %v54 = vld [vmem:[%s3] sm:$0xff]
    %v55 = vld [vmem:[%s3 + $0x8] sm:$0xff]
    %v56 = vld [vmem:[%s3 + $0x10] sm:$0xff]
    %v57 = vld [vmem:[%s3 + $0x18] sm:$0xff]
    %v58 = vld [vmem:[%s4] sm:$0x1]
    %v59 = vld [vmem:[%s5] sm:$0x1]
    %v60 = vld [vmem:[%s6] sm:$0xff]
    %v61 = vld [vmem:[%s6 + $0x8] sm:$0xff]
    %v62 = vld [vmem:[%s6 + $0x10] sm:$0xff]
    %v63 = vld [vmem:[%s6 + $0x18] sm:$0xff]
    %v64 = vld [vmem:[%s6 + $0x20] sm:$0xff]
    %v65 = vld [vmem:[%s6 + $0x28] sm:$0xff]
    %v66 = vld [vmem:[%s6 + $0x30] sm:$0xff]
    %v67 = vld [vmem:[%s6 + $0x38] sm:$0xff]
    %v68 = vld [vmem:[%s7] sm:$0x3]
    %v69 = vld [vmem:[%s8] sm:$0xff]
    %v70 = vld [vmem:[%s8 + $0x8] sm:$0xff]
    %v71 = vld [vmem:[%s8 + $0x10] sm:$0xff]
    %v72 = vld [vmem:[%s8 + $0x18] sm:$0xff]
    %v73 = vld [vmem:[%s8 + $0x20] sm:$0xff]
    %v74 = vld [vmem:[%s8 + $0x28] sm:$0xff]
    %v75 = vld [vmem:[%s8 + $0x30] sm:$0xff]
    %v76 = vld [vmem:[%s8 + $0x38] sm:$0xff]
    %v77 = vld [vmem:[%s8 + $0x40] sm:$0xff]
    %v78 = vld [vmem:[%s8 + $0x48] sm:$0xff]
    %v79 = vld [vmem:[%s8 + $0x50] sm:$0xff]
    %v80 = vld [vmem:[%s8 + $0x58] sm:$0xff]
    %v81 = vld [vmem:[%s8 + $0x60] sm:$0xff]
    %v82 = vld [vmem:[%s8 + $0x68] sm:$0xff]
    %v83 = vld [vmem:[%s8 + $0x70] sm:$0xff]
    %v84 = vld [vmem:[%s8 + $0x78] sm:$0xff]
    %v85 = vld [vmem:[%s8 + $0x80] sm:$0xff]
    %v86 = vld [vmem:[%s8 + $0x88] sm:$0xff]
    %v87 = vld [vmem:[%s8 + $0x90] sm:$0xff]
    %v88 = vld [vmem:[%s8 + $0x98] sm:$0xff]
    %v89 = vld [vmem:[%s8 + $0xa0] sm:$0xff]
    %v90 = vld [vmem:[%s8 + $0xa8] sm:$0xff]
    %v91 = vld [vmem:[%s8 + $0xb0] sm:$0xff]
    %v92 = vld [vmem:[%s8 + $0xb8] sm:$0xff]
    %v93 = vld [vmem:[%s8 + $0xc0] sm:$0xff]
    %v94 = vld [vmem:[%s8 + $0xc8] sm:$0xff]
    %v95 = vld [vmem:[%s8 + $0xd0] sm:$0xff]
    %v96 = vld [vmem:[%s8 + $0xd8] sm:$0xff]
    %v97 = vld [vmem:[%s8 + $0xe0] sm:$0xff]
    %v98 = vld [vmem:[%s8 + $0xe8] sm:$0xff]
    %v99 = vld [vmem:[%s8 + $0xf0] sm:$0xff]
    %v100 = vld [vmem:[%s8 + $0xf8] sm:$0xff]
    %v101 = vld [vmem:[%s9] sm:$0xff]
    %v102 = vld [vmem:[%s9 + $0x8] sm:$0xff]
    %v103 = vld [vmem:[%s9 + $0x10] sm:$0xff]
    %v104 = vld [vmem:[%s9 + $0x18] sm:$0xff]
    %v105 = vld [vmem:[%s9 + $0x20] sm:$0xff]
    %v106 = vld [vmem:[%s9 + $0x28] sm:$0xff]
    %v107 = vld [vmem:[%s9 + $0x30] sm:$0xff]
    %v108 = vld [vmem:[%s9 + $0x38] sm:$0xff]
    %v109 = vld [vmem:[%s9 + $0x40] sm:$0xff]
    %v110 = vld [vmem:[%s9 + $0x48] sm:$0xff]
    %v111 = vld [vmem:[#allocation4] sm:$0xff]
    %v112 = vld [vmem:[#allocation4 + $0x8] sm:$0xff]
    %v113 = vld [vmem:[%s0] sm:$0xff]
    %v114 = vld [vmem:[%s0 + $0x8] sm:$0xff]
    %v116 = vlaneseq
    %v117 = vshrl.u32 %v116, 7
    %v118 = vsub.s32 0, %v117
    %v119 = vrot.slane %v58, %v118
    %vm121 = vcmask 392192
    %v123 = vsel %vm121, %v113, 0
    %v126 = vsel %vm121, %v114, 0
    %128 = vmatprep.subr.mxu0 0.0
    %129 = vmatpush1.msra.mxu0 %v48
    %130 = vmatprep.subr.mxu0 0.0
    %131 = vmatpush1.msra.mxu0 %v49
    %132 = vmatprep.subr.mxu0 0.0
    %133 = vmatpush1.msra.mxu0 %v50
    %134 = vmatprep.subr.mxu0 0.0
    %135 = vmatpush1.msra.mxu0 %v51
    %136 = vmatprep.subr.mxu0 0.0
    %137 = vmatpush1.msra.mxu0 %v52
    %138 = vmatprep.subr.mxu0 0.0
    %139 = vmatpush1.msra.mxu0 %v53
    %140 = vmatprep.subr.mxu0 0.0
    %141 = vmatpush1.msra.mxu0 0.0
    %142 = vmatprep.subr.mxu0 0.0
    %143 = vmatpush1.msra.mxu0 0.0
    %144 = vmatprep.subr.mxu0 0.0
    %145 = vmatpush1.msra.mxu0 0.0
    %146 = vmatprep.subr.mxu0 0.0
    %147 = vmatpush1.msra.mxu0 0.0
    %148 = vmatprep.subr.mxu0 0.0
    %149 = vmatpush1.msra.mxu0 0.0
    %150 = vmatprep.subr.mxu0 0.0
    %151 = vmatpush1.msra.mxu0 0.0
    %152 = vmatprep.subr.mxu0 0.0
    %153 = vmatpush1.msra.mxu0 0.0
    %154 = vmatprep.subr.mxu0 0.0
    %155 = vmatpush1.msra.mxu0 0.0
    %156 = vmatprep.subr.mxu0 0.0
    %157 = vmatpush1.msra.mxu0 0.0
    %158 = vmatprep.subr.mxu0 0.0
    %159 = vmatpush1.msra.mxu0 0.0
    %160 = vmatprep.subr.mxu0 0.0
    %161 = vmatpush1.msra.mxu0 0.0
    %162 = vmatprep.subr.mxu0 0.0
    %163 = vmatpush1.msra.mxu0 0.0
    %164 = vmatprep.subr.mxu0 0.0
    %165 = vmatpush1.msra.mxu0 0.0
    %166 = vmatprep.subr.mxu0 0.0
    %167 = vmatpush1.msra.mxu0 0.0
    %168 = vmatprep.subr.mxu0 0.0
    %169 = vmatpush1.msra.mxu0 0.0
    %170 = vmatprep.subr.mxu0 0.0
    %171 = vmatpush1.msra.mxu0 0.0
    %172 = vmatprep.subr.mxu0 0.0
    %173 = vmatpush1.msra.mxu0 0.0
    %174 = vmatprep.subr.mxu0 0.0
    %175 = vmatpush1.msra.mxu0 0.0
    %176 = vmatprep.subr.mxu0 0.0
    %177 = vmatpush1.msra.mxu0 0.0
    %178 = vmatprep.subr.mxu0 0.0
    %179 = vmatpush1.msra.mxu0 0.0
    %180 = vmatprep.subr.mxu0 0.0
    %181 = vmatpush1.msra.mxu0 0.0
    %182 = vmatprep.subr.mxu0 0.0
    %183 = vmatpush1.msra.mxu0 0.0
    %184 = vmatprep.subr.mxu0 0.0
    %185 = vmatpush1.msra.mxu0 0.0
    %186 = vmatprep.subr.mxu0 0.0
    %187 = vmatpush1.msra.mxu0 0.0
    %188 = vmatprep.subr.mxu0 0.0
    %189 = vmatpush1.msra.mxu0 0.0
    %190 = vmatprep.subr.mxu0 0.0
    %191 = vmatpush1.msra.mxu0 0.0
    %192 = vmatprep.mubr.f32.mxu0 0.0
    %193 = vmatmul.mubr.f32.gmra.mrb[0].mxu0 %v123
    %v194 = vpop.f32.mrb[0].mxu0
    %v195 = vadd.f32 %v119, %v194
    %v196 = vpop.f32.mrb[0].mxu0
    %197 = vmatprep.mubr.f32.mxu0 0.0
    %198 = vmatmul.mubr.f32.gmra.mrb[0].mxu0 %v126
    %v199 = vpop.f32.mrb[0].mxu0
    %v200 = vadd.f32 %v119, %v199
    %v201 = vpop.f32.mrb[0].mxu0
    %202 = vdwg.mxu0
    %v204 = vlaneseq
    %v205 = vshrl.u32 %v204, 7
    %v206 = vsub.s32 0, %v205
    %v207 = vrot.slane %v59, %v206
    %vm209 = vcmask 261120
    %v211 = vsel %vm209, %v111, 0
    %v214 = vsel %vm209, %v112, 0
    %216 = vmatprep.subr.mxu0 0.0
    %217 = vmatpush1.msra.mxu0 %v54
    %218 = vmatprep.subr.mxu0 0.0
    %219 = vmatpush1.msra.mxu0 %v55
    %220 = vmatprep.subr.mxu0 0.0
    %221 = vmatpush1.msra.mxu0 %v56
    %222 = vmatprep.subr.mxu0 0.0
    %223 = vmatpush1.msra.mxu0 %v57
    %224 = vmatprep.subr.mxu0 0.0
    %225 = vmatpush1.msra.mxu0 0.0
    %226 = vmatprep.subr.mxu0 0.0
    %227 = vmatpush1.msra.mxu0 0.0
    %228 = vmatprep.subr.mxu0 0.0
    %229 = vmatpush1.msra.mxu0 0.0
    %230 = vmatprep.subr.mxu0 0.0
    %231 = vmatpush1.msra.mxu0 0.0
    %232 = vmatprep.subr.mxu0 0.0
    %233 = vmatpush1.msra.mxu0 0.0
    %234 = vmatprep.subr.mxu0 0.0
    %235 = vmatpush1.msra.mxu0 0.0
    %236 = vmatprep.subr.mxu0 0.0
    %237 = vmatpush1.msra.mxu0 0.0
    %238 = vmatprep.subr.mxu0 0.0
    %239 = vmatpush1.msra.mxu0 0.0
    %240 = vmatprep.subr.mxu0 0.0
    %241 = vmatpush1.msra.mxu0 0.0
    %242 = vmatprep.subr.mxu0 0.0
    %243 = vmatpush1.msra.mxu0 0.0
    %244 = vmatprep.subr.mxu0 0.0
    %245 = vmatpush1.msra.mxu0 0.0
    %246 = vmatprep.subr.mxu0 0.0
    %247 = vmatpush1.msra.mxu0 0.0
    %248 = vmatprep.subr.mxu0 0.0
    %249 = vmatpush1.msra.mxu0 0.0
    %250 = vmatprep.subr.mxu0 0.0
    %251 = vmatpush1.msra.mxu0 0.0
    %252 = vmatprep.subr.mxu0 0.0
    %253 = vmatpush1.msra.mxu0 0.0
    %254 = vmatprep.subr.mxu0 0.0
    %255 = vmatpush1.msra.mxu0 0.0
    %256 = vmatprep.subr.mxu0 0.0
    %257 = vmatpush1.msra.mxu0 0.0
    %258 = vmatprep.subr.mxu0 0.0
    %259 = vmatpush1.msra.mxu0 0.0
    %260 = vmatprep.subr.mxu0 0.0
    %261 = vmatpush1.msra.mxu0 0.0
    %262 = vmatprep.subr.mxu0 0.0
    %263 = vmatpush1.msra.mxu0 0.0
    %264 = vmatprep.subr.mxu0 0.0
    %265 = vmatpush1.msra.mxu0 0.0
    %266 = vmatprep.subr.mxu0 0.0
    %267 = vmatpush1.msra.mxu0 0.0
    %268 = vmatprep.subr.mxu0 0.0
    %269 = vmatpush1.msra.mxu0 0.0
    %270 = vmatprep.subr.mxu0 0.0
    %271 = vmatpush1.msra.mxu0 0.0
    %272 = vmatprep.subr.mxu0 0.0
    %273 = vmatpush1.msra.mxu0 0.0
    %274 = vmatprep.subr.mxu0 0.0
    %275 = vmatpush1.msra.mxu0 0.0
    %276 = vmatprep.subr.mxu0 0.0
    %277 = vmatpush1.msra.mxu0 0.0
    %278 = vmatprep.subr.mxu0 0.0
    %279 = vmatpush1.msra.mxu0 0.0
    %280 = vmatprep.mubr.f32.mxu0 0.0
    %281 = vmatmul.mubr.f32.gmra.mrb[0].mxu0 %v211
    %v282 = vpop.f32.mrb[0].mxu0
    %v283 = vadd.f32 %v207, %v282
    %v284 = vpop.f32.mrb[0].mxu0
    %285 = vmatprep.mubr.f32.mxu0 0.0
    %286 = vmatmul.mubr.f32.gmra.mrb[0].mxu0 %v214
    %v287 = vpop.f32.mrb[0].mxu0
    %v288 = vadd.f32 %v207, %v287
    %v289 = vpop.f32.mrb[0].mxu0
    %290 = vdwg.mxu0
    %v291 = vadd.f32 %v195, %v283
    %v292 = vadd.f32 %v200, %v288
    %v293 = vxor.u32 %v291, 2147483648
    %v294 = vxor.u32 %v292, 2147483648
    %v295 = vmul.f32 %v293, 1.442695
    %v296 = vpow.pop %v295
    %v297 = vmul.f32 %v294, 1.442695
    %v298 = vpow.pop %v297
    %v299 = vadd.f32 %v296, 1.0
    %v300 = vadd.f32 %v298, 1.0
    %v301 = vrcp.pop %v299
    %v302 = vmul.f32 1.0, %v301
    %v303 = vrcp.pop %v300
    %v304 = vmul.f32 1.0, %v303
    %307 = vrot.lane.b32.xlu0 %v283, 64
    %v308 = vpop.permute.xlu0 %307
    %309 = vrot.lane.b32.xlu0 %v288, 64
    %v310 = vpop.permute.xlu0 %309
    %v313 = vmul.f32 %v302, %v308
    %v314 = vmul.f32 %v304, %v310
    %317 = vrot.lane.b32.xlu0 %v313, 64
    %v318 = vpop.permute.xlu0 %317
    %319 = vrot.lane.b32.xlu0 %v314, 64
    %v320 = vpop.permute.xlu0 %319
    %v323 = vadd.f32 %v195, %v318
    %v324 = vadd.f32 %v200, %v320
    %v325 = vtanh.pop %v323
    %v326 = vtanh.pop %v324
    %v327 = vsub.f32 1.0, %v302
    %v328 = vsub.f32 1.0, %v304
    %331 = vrot.lane.b32.xlu0 %v325, 96
    %v332 = vpop.permute.xlu0 %331
    %333 = vrot.lane.b32.xlu0 %v326, 96
    %v334 = vpop.permute.xlu0 %333
    %v337 = vmul.f32 %v327, %v332
    %v338 = vmul.f32 %v328, %v334
    %339 = vrot.lane.b32.xlu0 %v111, 32
    %v340 = vpop.permute.xlu0 %339
    %341 = vrot.lane.b32.xlu0 %v112, 32
    %v342 = vpop.permute.xlu0 %341
    %v345 = vmul.f32 %v302, %v340
    %v346 = vmul.f32 %v304, %v342
    %v347 = vadd.f32 %v337, %v345
    %v348 = vadd.f32 %v338, %v346
    %v350 = vlaneseq
    %v351 = vshrl.u32 %v350, 7
    %v352 = vsub.s32 0, %v351
    %v353 = vrot.slane %v68, %v352
    %v354 = vlaneseq
    %v355 = vshrl.u32 %v354, 7
    %v356 = vsub.s32 1, %v355
    %v357 = vrot.slane %v68, %v356
    %362 = vrot.lane.b32.xlu0 %v347, 96
    %v363 = vpop.permute.xlu0 %362
    %364 = vrot.lane.b32.xlu0 %v348, 96
    %v365 = vpop.permute.xlu0 %364
    %v366 = vsel %vm209, %v363, 0
    %v368 = vsel %vm209, %v365, 0
    %370 = vmatprep.subr.mxu0 %v61
    %371 = vmatpush1.msra.mxu0 %v60
    %372 = vmatprep.subr.mxu0 %v63
    %373 = vmatpush1.msra.mxu0 %v62
    %374 = vmatprep.subr.mxu0 %v65
    %375 = vmatpush1.msra.mxu0 %v64
    %376 = vmatprep.subr.mxu0 %v67
    %377 = vmatpush1.msra.mxu0 %v66
    %378 = vmatprep.subr.mxu0 0.0
    %379 = vmatpush1.msra.mxu0 0.0
    %380 = vmatprep.subr.mxu0 0.0
    %381 = vmatpush1.msra.mxu0 0.0
    %382 = vmatprep.subr.mxu0 0.0
    %383 = vmatpush1.msra.mxu0 0.0
    %384 = vmatprep.subr.mxu0 0.0
    %385 = vmatpush1.msra.mxu0 0.0
    %386 = vmatprep.subr.mxu0 0.0
    %387 = vmatpush1.msra.mxu0 0.0
    %388 = vmatprep.subr.mxu0 0.0
    %389 = vmatpush1.msra.mxu0 0.0
    %390 = vmatprep.subr.mxu0 0.0
    %391 = vmatpush1.msra.mxu0 0.0
    %392 = vmatprep.subr.mxu0 0.0
    %393 = vmatpush1.msra.mxu0 0.0
    %394 = vmatprep.subr.mxu0 0.0
    %395 = vmatpush1.msra.mxu0 0.0
    %396 = vmatprep.subr.mxu0 0.0
    %397 = vmatpush1.msra.mxu0 0.0
    %398 = vmatprep.subr.mxu0 0.0
    %399 = vmatpush1.msra.mxu0 0.0
    %400 = vmatprep.subr.mxu0 0.0
    %401 = vmatpush1.msra.mxu0 0.0
    %402 = vmatprep.subr.mxu0 0.0
    %403 = vmatpush1.msra.mxu0 0.0
    %404 = vmatprep.subr.mxu0 0.0
    %405 = vmatpush1.msra.mxu0 0.0
    %406 = vmatprep.subr.mxu0 0.0
    %407 = vmatpush1.msra.mxu0 0.0
    %408 = vmatprep.subr.mxu0 0.0
    %409 = vmatpush1.msra.mxu0 0.0
    %410 = vmatprep.subr.mxu0 0.0
    %411 = vmatpush1.msra.mxu0 0.0
    %412 = vmatprep.subr.mxu0 0.0
    %413 = vmatpush1.msra.mxu0 0.0
    %414 = vmatprep.subr.mxu0 0.0
    %415 = vmatpush1.msra.mxu0 0.0
    %416 = vmatprep.subr.mxu0 0.0
    %417 = vmatpush1.msra.mxu0 0.0
    %418 = vmatprep.subr.mxu0 0.0
    %419 = vmatpush1.msra.mxu0 0.0
    %420 = vmatprep.subr.mxu0 0.0
    %421 = vmatpush1.msra.mxu0 0.0
    %422 = vmatprep.subr.mxu0 0.0
    %423 = vmatpush1.msra.mxu0 0.0
    %424 = vmatprep.subr.mxu0 0.0
    %425 = vmatpush1.msra.mxu0 0.0
    %426 = vmatprep.subr.mxu0 0.0
    %427 = vmatpush1.msra.mxu0 0.0
    %428 = vmatprep.subr.mxu0 0.0
    %429 = vmatpush1.msra.mxu0 0.0
    %430 = vmatprep.subr.mxu0 0.0
    %431 = vmatpush1.msra.mxu0 0.0
    %432 = vmatprep.subr.mxu0 0.0
    %433 = vmatpush1.msra.mxu0 0.0
    %434 = vmatprep.mubr.f32.mxu0 0.0
    %435 = vmatmul.mubr.f32.gmra.mrb[0].mxu0 %v366
    %v436 = vpop.f32.mrb[0].mxu0
    %v437 = vadd.f32 %v353, %v436
    %v438 = vpop.f32.mrb[0].mxu0
    %v439 = vadd.f32 %v357, %v438
    %440 = vmatprep.mubr.f32.mxu0 0.0
    %441 = vmatmul.mubr.f32.gmra.mrb[0].mxu0 %v368
    %v442 = vpop.f32.mrb[0].mxu0
    %v443 = vadd.f32 %v353, %v442
    %v444 = vpop.f32.mrb[0].mxu0
    %v445 = vadd.f32 %v357, %v444
    %446 = vdwg.mxu0
    %v447 = vmax.f32 %v437, %v439
    %448 = vmax.xlane.f32.xlu0 %v447
    %v449 = vpop.xlane.xlu0 %448
    %v450 = vmax.f32 %v443, %v445
    %451 = vmax.xlane.f32.xlu0 %v450
    %v452 = vpop.xlane.xlu0 %451
    %v453 = vsub.f32 %v437, %v449
    %v454 = vsub.f32 %v439, %v449
    %v455 = vsub.f32 %v443, %v452
    %v456 = vsub.f32 %v445, %v452
    %v457 = vmax.f32 %v453, -80.0
    %v458 = vmax.f32 %v454, -80.0
    %v459 = vmax.f32 %v455, -80.0
    %v460 = vmax.f32 %v456, -80.0
    %v461 = vmul.f32 %v457, 1.442695
    %v462 = vpow.pop %v461
    %v463 = vmul.f32 %v458, 1.442695
    %v464 = vpow.pop %v463
    %v465 = vmul.f32 %v459, 1.442695
    %v466 = vpow.pop %v465
    %v467 = vmul.f32 %v460, 1.442695
    %v468 = vpow.pop %v467
    %469 = vmatprep.subr.mxu0 0.0
    %470 = vmatpush1.msra.mxu0 %v69
    %471 = vmatprep.subr.mxu0 0.0
    %472 = vmatpush1.msra.mxu0 %v70
    %473 = vmatprep.subr.mxu0 0.0
    %474 = vmatpush1.msra.mxu0 %v71
    %475 = vmatprep.subr.mxu0 0.0
    %476 = vmatpush1.msra.mxu0 %v72
    %477 = vmatprep.subr.mxu0 0.0
    %478 = vmatpush1.msra.mxu0 %v73
    %479 = vmatprep.subr.mxu0 0.0
    %480 = vmatpush1.msra.mxu0 %v74
    %481 = vmatprep.subr.mxu0 0.0
    %482 = vmatpush1.msra.mxu0 %v75
    %483 = vmatprep.subr.mxu0 0.0
    %484 = vmatpush1.msra.mxu0 %v76
    %485 = vmatprep.subr.mxu0 0.0
    %486 = vmatpush1.msra.mxu0 %v77
    %487 = vmatprep.subr.mxu0 0.0
    %488 = vmatpush1.msra.mxu0 %v78
    %489 = vmatprep.subr.mxu0 0.0
    %490 = vmatpush1.msra.mxu0 %v79
    %491 = vmatprep.subr.mxu0 0.0
    %492 = vmatpush1.msra.mxu0 %v80
    %493 = vmatprep.subr.mxu0 0.0
    %494 = vmatpush1.msra.mxu0 %v81
    %495 = vmatprep.subr.mxu0 0.0
    %496 = vmatpush1.msra.mxu0 %v82
    %497 = vmatprep.subr.mxu0 0.0
    %498 = vmatpush1.msra.mxu0 %v83
    %499 = vmatprep.subr.mxu0 0.0
    %500 = vmatpush1.msra.mxu0 %v84
    %501 = vmatprep.subr.mxu0 0.0
    %502 = vmatpush1.msra.mxu0 %v85
    %503 = vmatprep.subr.mxu0 0.0
    %504 = vmatpush1.msra.mxu0 %v86
    %505 = vmatprep.subr.mxu0 0.0
    %506 = vmatpush1.msra.mxu0 %v87
    %507 = vmatprep.subr.mxu0 0.0
    %508 = vmatpush1.msra.mxu0 %v88
    %509 = vmatprep.subr.mxu0 0.0
    %510 = vmatpush1.msra.mxu0 %v89
    %511 = vmatprep.subr.mxu0 0.0
    %512 = vmatpush1.msra.mxu0 %v90
    %513 = vmatprep.subr.mxu0 0.0
    %514 = vmatpush1.msra.mxu0 %v91
    %515 = vmatprep.subr.mxu0 0.0
    %516 = vmatpush1.msra.mxu0 %v92
    %517 = vmatprep.subr.mxu0 0.0
    %518 = vmatpush1.msra.mxu0 %v93
    %519 = vmatprep.subr.mxu0 0.0
    %520 = vmatpush1.msra.mxu0 %v94
    %521 = vmatprep.subr.mxu0 0.0
    %522 = vmatpush1.msra.mxu0 %v95
    %523 = vmatprep.subr.mxu0 0.0
    %524 = vmatpush1.msra.mxu0 %v96
    %525 = vmatprep.subr.mxu0 0.0
    %526 = vmatpush1.msra.mxu0 %v97
    %527 = vmatprep.subr.mxu0 0.0
    %528 = vmatpush1.msra.mxu0 %v98
    %529 = vmatprep.subr.mxu0 0.0
    %530 = vmatpush1.msra.mxu0 %v99
    %531 = vmatprep.subr.mxu0 0.0
    %532 = vmatpush1.msra.mxu0 %v100
    %533 = vmatprep.mubr.f32.mxu0 %v464
    %534 = vmatmul.mubr.f32.gmra.mrb[0].mxu0 %v462
    %v535 = vpop.f32.mrb[0].mxu0
    %v536 = vadd.f32 0.0, %v535
    %v537 = vpop.f32.mrb[0].mxu0
    %538 = vmatprep.mubr.f32.mxu0 %v468
    %539 = vmatmul.mubr.f32.gmra.mrb[0].mxu0 %v466
    %v540 = vpop.f32.mrb[0].mxu0
    %v541 = vadd.f32 0.0, %v540
    %v542 = vpop.f32.mrb[0].mxu0
    %543 = vdwg.mxu0
    %v544 = vrcp.pop %v536
    %v545 = vmul.f32 1.0, %v544
    %v546 = vrcp.pop %v541
    %v547 = vmul.f32 1.0, %v546
    %vm548 = vcmask 326656
    %v550 = vsel %vm548, %v545, 0
    %v553 = vsel %vm548, %v547, 0
    %555 = vmatprep.subr.mxu0 %v102
    %556 = vmatpush1.msra.mxu0 %v101
    %557 = vmatprep.subr.mxu0 %v104
    %558 = vmatpush1.msra.mxu0 %v103
    %559 = vmatprep.subr.mxu0 %v106
    %560 = vmatpush1.msra.mxu0 %v105
    %561 = vmatprep.subr.mxu0 %v108
    %562 = vmatpush1.msra.mxu0 %v107
    %563 = vmatprep.subr.mxu0 %v110
    %564 = vmatpush1.msra.mxu0 %v109
    %565 = vmatprep.subr.mxu0 0.0
    %566 = vmatpush1.msra.mxu0 0.0
    %567 = vmatprep.subr.mxu0 0.0
    %568 = vmatpush1.msra.mxu0 0.0
    %569 = vmatprep.subr.mxu0 0.0
    %570 = vmatpush1.msra.mxu0 0.0
    %571 = vmatprep.subr.mxu0 0.0
    %572 = vmatpush1.msra.mxu0 0.0
    %573 = vmatprep.subr.mxu0 0.0
    %574 = vmatpush1.msra.mxu0 0.0
    %575 = vmatprep.subr.mxu0 0.0
    %576 = vmatpush1.msra.mxu0 0.0
    %577 = vmatprep.subr.mxu0 0.0
    %578 = vmatpush1.msra.mxu0 0.0
    %579 = vmatprep.subr.mxu0 0.0
    %580 = vmatpush1.msra.mxu0 0.0
    %581 = vmatprep.subr.mxu0 0.0
    %582 = vmatpush1.msra.mxu0 0.0
    %583 = vmatprep.subr.mxu0 0.0
    %584 = vmatpush1.msra.mxu0 0.0
    %585 = vmatprep.subr.mxu0 0.0
    %586 = vmatpush1.msra.mxu0 0.0
    %587 = vmatprep.subr.mxu0 0.0
    %588 = vmatpush1.msra.mxu0 0.0
    %589 = vmatprep.subr.mxu0 0.0
    %590 = vmatpush1.msra.mxu0 0.0
    %591 = vmatprep.subr.mxu0 0.0
    %592 = vmatpush1.msra.mxu0 0.0
    %593 = vmatprep.subr.mxu0 0.0
    %594 = vmatpush1.msra.mxu0 0.0
    %595 = vmatprep.subr.mxu0 0.0
    %596 = vmatpush1.msra.mxu0 0.0
    %597 = vmatprep.subr.mxu0 0.0
    %598 = vmatpush1.msra.mxu0 0.0
    %599 = vmatprep.subr.mxu0 0.0
    %600 = vmatpush1.msra.mxu0 0.0
    %601 = vmatprep.subr.mxu0 0.0
    %602 = vmatpush1.msra.mxu0 0.0
    %603 = vmatprep.subr.mxu0 0.0
    %604 = vmatpush1.msra.mxu0 0.0
    %605 = vmatprep.subr.mxu0 0.0
    %606 = vmatpush1.msra.mxu0 0.0
    %607 = vmatprep.subr.mxu0 0.0
    %608 = vmatpush1.msra.mxu0 0.0
    %609 = vmatprep.subr.mxu0 0.0
    %610 = vmatpush1.msra.mxu0 0.0
    %611 = vmatprep.subr.mxu0 0.0
    %612 = vmatpush1.msra.mxu0 0.0
    %613 = vmatprep.subr.mxu0 0.0
    %614 = vmatpush1.msra.mxu0 0.0
    %615 = vmatprep.subr.mxu0 0.0
    %616 = vmatpush1.msra.mxu0 0.0
    %617 = vmatprep.subr.mxu0 0.0
    %618 = vmatpush1.msra.mxu0 0.0
    %619 = vmatprep.mubr.f32.mxu0 0.0
    %620 = vmatmul.mubr.f32.gmra.mrb[0].mxu0 %v550
    %v621 = vpop.f32.mrb[0].mxu0
    %v622 = vadd.f32 0.0, %v621
    %v623 = vpop.f32.mrb[0].mxu0
    %v624 = vadd.f32 0.0, %v623
    %625 = vmatprep.mubr.f32.mxu0 0.0
    %626 = vmatmul.mubr.f32.gmra.mrb[0].mxu0 %v553
    %v627 = vpop.f32.mrb[0].mxu0
    %v628 = vadd.f32 0.0, %v627
    %v629 = vpop.f32.mrb[0].mxu0
    %v630 = vadd.f32 0.0, %v629
    %631 = vdwg.mxu0
    %v632 = vmul.f32 %v462, %v622
    %v633 = vmul.f32 %v464, %v624
    %v634 = vmul.f32 %v466, %v628
    %v635 = vmul.f32 %v468, %v630
    %636 = vst [vmem:[#allocation2] sm:$0xff] %v632
    %637 = vst [vmem:[#allocation2 + $0x8] sm:$0xff] %v633
    %638 = vst [vmem:[#allocation2 + $0x10] sm:$0xff] %v634
    %639 = vst [vmem:[#allocation2 + $0x18] sm:$0xff] %v635
    %642 = vst.msk [vmem:[#allocation4] sm:$0xff] %vm209, %v363
    %643 = vst.msk [vmem:[#allocation4 + $0x8] sm:$0xff] %vm209, %v365
    // Predicated region
    $region46: #{tpu_custom_call.1} parent=1 // pred_check
      _
    $region47: #{tpu_custom_call.1} parent=1 // pred_check_branch
      %645 = sbr.rel (0) target = $region49
    $region48: #{tpu_custom_call.1} parent=1 // pred_region
      %s647 = ssub.s32 512, 512
      %648 = vsyncadd [#allocation3], %s647
      %s649 = sshll.u32 [#allocation2], 4
      %s650 = int_to_ptr.vmem [resolvable:$true] %s649
      %655 = dma.vmem_to_hbm [thread:$0]  %s650, 512, %s10, [#allocation3], 256, 256, 16
    $region49: #{tpu_custom_call.1} parent=1 // pred_fallthru
      _
    // Predicated region
    $region50: #{tpu_custom_call.1} parent=1 // pred_check
      _
    $region51: #{tpu_custom_call.1} parent=1 // pred_check_branch
      %657 = sbr.rel (0) target = $region53
    $region52: #{tpu_custom_call.1} parent=1 // pred_region
      %s659 = ssub.s32 256, 256
      %660 = vsyncadd [#allocation5], %s659
      %s661 = sshll.u32 [#allocation4], 4
      %s662 = int_to_ptr.vmem [resolvable:$true] %s661
      %667 = dma.vmem_to_hbm [thread:$0]  %s662, 256, %s11, [#allocation5], 128, 128, 8
    $region53: #{tpu_custom_call.1} parent=1 // pred_fallthru
      _
    // Predicated region
    $region54: #{tpu_custom_call.1} parent=1 // pred_check
      _
    $region55: #{tpu_custom_call.1} parent=1 // pred_check_branch
      %669 = sbr.rel (0) target = $region57
    $region56: #{tpu_custom_call.1} parent=1 // pred_region
      %670 = dma.done [#allocation3], 512
    $region57: #{tpu_custom_call.1} parent=1 // pred_fallthru
      _
    // Predicated region
    $region58: #{tpu_custom_call.1} parent=1 // pred_check
      _
    $region59: #{tpu_custom_call.1} parent=1 // pred_check_branch
      %672 = sbr.rel (0) target = $region61
    $region60: #{tpu_custom_call.1} parent=1 // pred_region
      %673 = dma.done [#allocation5], 256
    $region61: #{tpu_custom_call.1} parent=1 // pred_fallthru
      _
    %674 = vsyncpa [#allocation3], 1
    %675 = vsyncpa [#allocation5], 1

</llo_original>
